<compile_context>
chip_gen: v7x
topology: tpu7x:2x2x1
jax: 0.10.0
libtpu: 0.0.40
codegen_flags: <defaults>
</compile_context>

<pallas_src>
import functools

import jax
import jax.numpy as jnp
from jax.experimental import pallas as pl
from jax.experimental.pallas import tpu as pltpu


def _vmem_limit_bytes():
    """Chip-aware scoped-VMEM limit (v5e defaults to only 16 MiB of 128 MiB)."""
    default = 64 * 1024 * 1024
    try:
        info = pltpu.get_tpu_info()
        cap = getattr(info, "vmem_capacity_bytes", None)
        if not cap:
            return default
        return cap * 3 // 4          # leave headroom for compiler-internal scratch
    except Exception:
        return default


def _tile_candidates(dim):
    """Tile sizes that evenly divide `dim`: lane-aligned multiples of 128 plus the
    full dimension, largest first (bigger tiles => closer to the HBM roofline)."""
    cands = {dim}
    t = 128
    while t < dim:
        if dim % t == 0:
            cands.add(t)
        t += 128
    return sorted(cands, reverse=True)


def _auto_tiles(D, N, B, w_bytes, budget_bytes):
    """Largest (tile_k, tile_n) whose double-buffered working set fits the budget."""
    def need(tk, tn):
        return (2 * tk * tn * w_bytes        # W tile, double-buffered (dominant)
                + 2 * B * tk * w_bytes       # x tile, double-buffered
                + 2 * tn * w_bytes           # bias tile
                + 2 * B * tn * 4             # output tile (f32)
                + 2 * B * tn * 4)            # acc (+ gmin) scratch (f32)

    for tn in _tile_candidates(N):           # prefer lane-dense (wide) output tiles
        for tk in _tile_candidates(D):
            if need(tk, tn) <= budget_bytes:
                return tk, tn
    return _tile_candidates(D)[-1], _tile_candidates(N)[-1]


def _make_kernel(mode, E, group_size, num_k_tiles):
    """Kernel body for one (static) reduction mode."""
    S = group_size
    Kt = num_k_tiles

    def body(x_ref, w_ref, b_ref, o_ref, acc_ref, gmin_ref):
        e = pl.program_id(1)
        k = pl.program_id(2)

        @pl.when(k == 0)
        def _():
            acc_ref[...] = jnp.zeros_like(acc_ref)

        # (B, tk) @ (tk, tn) on the MXU, f32 accumulation over the K tiles.
        acc_ref[...] += jnp.dot(x_ref[...], w_ref[...],
                                preferred_element_type=jnp.float32)

        last_k = k == Kt - 1
        # Cheap VPU add; only consumed when last_k is true.
        y = acc_ref[...] + b_ref[...].astype(jnp.float32)

        if mode == "none":
            # Output block (e, 0, n): just write this member's tile.
            @pl.when(last_k)
            def _():
                o_ref[...] = y

        elif mode == "mean":
            @pl.when(last_k & (e == 0))
            def _():
                o_ref[...] = y

            @pl.when(last_k & (e != 0))
            def _():
                o_ref[...] = o_ref[...] + y

            @pl.when(last_k & (e == E - 1))
            def _():
                o_ref[...] = o_ref[...] * (1.0 / E)

        elif mode in ("min", "max"):
            comb = jnp.minimum if mode == "min" else jnp.maximum

            @pl.when(last_k & (e == 0))
            def _():
                o_ref[...] = y

            @pl.when(last_k & (e != 0))
            def _():
                o_ref[...] = comb(o_ref[...], y)

        elif mode == "max_of_group_mins":
            # E = G * S members; min inside each group of S consecutive members,
            # then max over the G group-minima.
            loc = e % S
            gi = e // S

            @pl.when(last_k & (loc == 0))
            def _():
                gmin_ref[...] = y

            @pl.when(last_k & (loc != 0))
            def _():
                gmin_ref[...] = jnp.minimum(gmin_ref[...], y)

            @pl.when(last_k & (loc == S - 1) & (gi == 0))
            def _():
                o_ref[...] = gmin_ref[...]

            @pl.when(last_k & (loc == S - 1) & (gi != 0))
            def _():
                o_ref[...] = jnp.maximum(o_ref[...], gmin_ref[...])

        else:
            raise ValueError(mode)

    if mode == "max_of_group_mins":
        def kernel(x_ref, w_ref, b_ref, o_ref, acc_ref, gmin_ref):
            body(x_ref, w_ref, b_ref, o_ref, acc_ref, gmin_ref)
    else:
        def kernel(x_ref, w_ref, b_ref, o_ref, acc_ref):
            body(x_ref, w_ref, b_ref, o_ref, acc_ref, None)

    return kernel


@functools.partial(
    jax.jit,
    static_argnames=("ensemble_reduction", "num_groups", "tile_n", "tile_k",
                     "param_dtype"))
def ensemble_forward(x, W, b, *, ensemble_reduction, num_groups=1,
                     tile_n=None, tile_k=None, param_dtype=jnp.bfloat16):
    """EnsembleModule.forward for an ensemble of linear models.

    x: (B, D)   W: (E, D, N)   b: (E, N)
    Returns (B, N) for reduced modes, (E, B, N) for 'none'.
    """
    assert ensemble_reduction in ("none", "mean", "min", "max",
                                  "max_of_group_mins")
    E, D, N = W.shape
    B = x.shape[0]

    if ensemble_reduction == "max_of_group_mins":
        assert E % num_groups == 0
        group_size = E // num_groups
    else:
        group_size = 1  # unused

    # 'mean' fast path: x @ mean_e(W) + mean_e(b) is algebraically identical and
    # reads E-times fewer weight bytes from HBM (the kernel is weight-BW bound).
    if ensemble_reduction == "mean":
        W = jnp.mean(W.astype(jnp.float32), axis=0, keepdims=True)
        b = jnp.mean(b.astype(jnp.float32), axis=0, keepdims=True)
        E = 1

    # Stream params in a narrow dtype (bf16 = native MXU input); f32 accumulation.
    x = x.astype(param_dtype)
    W = W.astype(param_dtype)
    b = b.astype(param_dtype)
    b3 = b.reshape(E, 1, N)

    vmem_limit = int(_vmem_limit_bytes())
    w_bytes = jnp.dtype(param_dtype).itemsize
    auto_tk, auto_tn = _auto_tiles(D, N, B, w_bytes, int(vmem_limit * 0.8))
    tk = tile_k if tile_k is not None else auto_tk
    tn = tile_n if tile_n is not None else auto_tn
    assert D % tk == 0 and (tk % 128 == 0 or tk == D), (tk, D)
    assert N % tn == 0 and (tn % 128 == 0 or tn == N), (tn, N)
    Kt, Nt = D // tk, N // tn

    if ensemble_reduction == "none":
        out_shape = jax.ShapeDtypeStruct((E, B, N), jnp.float32)
        out_spec = pl.BlockSpec((None, B, tn), lambda n, e, k: (e, 0, n))
        dim_sem = ("parallel", "parallel", "arbitrary")
    else:
        out_shape = jax.ShapeDtypeStruct((B, N), jnp.float32)
        # Same output block across (e, k) -> VMEM-resident ensemble accumulator.
        out_spec = pl.BlockSpec((B, tn), lambda n, e, k: (0, n))
        dim_sem = ("parallel", "arbitrary", "arbitrary")

    scratch = [pltpu.VMEM((B, tn), jnp.float32)]            # K-tile accumulator
    if ensemble_reduction == "max_of_group_mins":
        scratch.append(pltpu.VMEM((B, tn), jnp.float32))    # group-min (only here)

    kernel = _make_kernel(ensemble_reduction, E, group_size, Kt)

    # TODO(synk): for very large B, tile B as a second 'parallel' grid axis; for
    # very small per-member tiles, block several ensemble members per grid step
    # (fori_loop unroll) to amortize the ~0.35us per-step overhead.
    return pl.pallas_call(
        kernel,
        out_shape=out_shape,
        grid_spec=pltpu.PrefetchScalarGridSpec(
            num_scalar_prefetch=0,
            grid=(Nt, E, Kt),
            in_specs=[
                pl.BlockSpec((B, tk), lambda n, e, k: (0, k)),            # x K-tile
                pl.BlockSpec((None, tk, tn), lambda n, e, k: (e, k, n)),  # W[e] tile
                pl.BlockSpec((None, 1, tn), lambda n, e, k: (e, 0, n)),   # b[e] tile
            ],
            out_specs=out_spec,
            scratch_shapes=scratch,
        ),
        compiler_params=pltpu.CompilerParams(
            dimension_semantics=dim_sem,
            vmem_limit_bytes=vmem_limit,
        ),
    )(x, W, b3)


def _reference(x, W, b, mode, num_groups=1):
    """Pure-JAX reference (f32 accumulation on the given-precision params)."""
    ys = (jnp.einsum("bd,edn->ebn", x.astype(jnp.float32), W.astype(jnp.float32))
          + b.astype(jnp.float32)[:, None, :])
    if mode == "none":
        return ys
    if mode == "mean":
        return ys.mean(0)
    if mode == "min":
        return ys.min(0)
    if mode == "max":
        return ys.max(0)
    if mode == "max_of_group_mins":
        E = W.shape[0]
        G = num_groups
        return ys.reshape(G, E // G, *ys.shape[1:]).min(1).max(0)
    raise ValueError(mode)


if __name__ == "__main__":
    # Ensemble of E=4 linear members (2 groups of 2). Small shapes, but with
    # explicit 128-tiles over D=N=256 so the multi-tile (N, E, K) grid path runs.
    E, B, D, N = 4, 8, 256, 256
    G = 2

    key = jax.random.PRNGKey(0)
    kx, kw, kb = jax.random.split(key, 3)
    x = jax.random.normal(kx, (B, D), dtype=jnp.float32)
    W = jax.random.normal(kw, (E, D, N), dtype=jnp.float32) * 0.05
    b = jax.random.normal(kb, (E, N), dtype=jnp.float32) * 0.1

    # Reference uses the same bf16-rounded params so the comparison isolates the
    # kernel (tiling / accumulation order), not the precision choice.
    xp = x.astype(jnp.bfloat16)
    Wp = W.astype(jnp.bfloat16)
    bp = b.astype(jnp.bfloat16)

    ok = True
    for mode in ("mean", "min", "max", "max_of_group_mins", "none"):
        out = ensemble_forward(x, W, b, ensemble_reduction=mode, num_groups=G,
                               tile_n=128, tile_k=128)
        out = jax.block_until_ready(out)
        ref = _reference(xp, Wp, bp, mode, num_groups=G)
        if not jnp.allclose(out, ref, atol=1e-2, rtol=1e-2):
            ok = False
            print(f"MISMATCH in mode {mode}: "
                  f"max abs err {float(jnp.max(jnp.abs(out - ref)))}")

    # Also exercise the auto tile picker / default path once.
    out = jax.block_until_ready(ensemble_forward(x, W, b,
                                                 ensemble_reduction="min"))
    ref = _reference(xp, Wp, bp, "min")
    if not jnp.allclose(out, ref, atol=1e-2, rtol=1e-2):
        ok = False
        print("MISMATCH in auto-tile 'min' path: "
              f"max abs err {float(jnp.max(jnp.abs(out - ref)))}")

    # TODO(synk): 'lcb'/'ucb'/'gaussian_expected_*'/'specific_group_mean'
    # reductions exist in reduce_ensemble but are asserted-out by
    # EnsembleModule.forward, so they are intentionally not implemented here.
    # TODO(synk): arbitrary (non-linear) ensemble members and
    # ensemble_model_wise_kwargs have no single-kernel equivalent; this kernel
    # covers ensembles of linear members y_e = x @ W[e] + b[e].

    if ok:
        print("KERNEL_OK")
</pallas_src>

<mosaic_0001>
module attributes {stable_mosaic.version = 11 : i64} {
  func.func @kernel(%arg0: i32, %arg1: i32, %arg2: i32, %arg3: memref<8x128xbf16, #tpu.memory_space<vmem>>, %arg4: memref<1x128x128xbf16, #tpu.memory_space<vmem>>, %arg5: memref<1x1x128xbf16, #tpu.memory_space<vmem>>, %arg6: memref<8x128xf32, #tpu.memory_space<vmem>>, %arg7: memref<8x128xf32, #tpu.memory_space<vmem>>) attributes {dimension_semantics = [#tpu.dimension_semantics<parallel>, #tpu.dimension_semantics<arbitrary>, #tpu.dimension_semantics<arbitrary>], iteration_bounds = array<i64: 2, 1, 2>, scalar_prefetch = 0 : i64, scratch_operands = 1 : i64, tpu.core_type = #tpu.core_type<tc>, window_params = [{transform_indices = @transform_0, window_bounds = array<i64: 8, 128>}, {transform_indices = @transform_1, window_bounds = array<i64: 1, 128, 128>}, {transform_indices = @transform_2, window_bounds = array<i64: 1, 1, 128>}, {transform_indices = @transform_3, window_bounds = array<i64: 8, 128>}]} {
    %c0_i32 = arith.constant 0 : i32
    %0 = arith.cmpi eq, %arg2, %c0_i32 : i32
    %1 = arith.extui %0 : i1 to i32
    %c0_i32_0 = arith.constant 0 : i32
    %2 = arith.cmpi ne, %1, %c0_i32_0 : i32
    scf.if %2 {
      %cst_20 = arith.constant 0.000000e+00 : f32
      %29 = vector.broadcast %cst_20 : f32 to vector<8x128xf32>
      %c0_21 = arith.constant 0 : index
      %c0_22 = arith.constant 0 : index
      %30 = vector.load %arg7[%c0_21, %c0_22] : memref<8x128xf32, #tpu.memory_space<vmem>>, vector<8x128xf32>
      tpu.vector_store %arg7[%c0_21, %c0_22], %29 {strides = array<i32>} : memref<8x128xf32, #tpu.memory_space<vmem>>, vector<8x128xf32>,
    } else {
    }
    %c0 = arith.constant 0 : index
    %c0_1 = arith.constant 0 : index
    %3 = vector.load %arg7[%c0, %c0_1] : memref<8x128xf32, #tpu.memory_space<vmem>>, vector<8x128xf32>
    %c0_2 = arith.constant 0 : index
    %c0_3 = arith.constant 0 : index
    %4 = vector.load %arg3[%c0_2, %c0_3] : memref<8x128xbf16, #tpu.memory_space<vmem>>, vector<8x128xbf16>
    %c0_4 = arith.constant 0 : index
    %c0_5 = arith.constant 0 : index
    %c0_6 = arith.constant 0 : index
    %5 = vector.load %arg4[%c0_4, %c0_5, %c0_6] : memref<1x128x128xbf16, #tpu.memory_space<vmem>>, vector<1x128x128xbf16>
    %6 = vector.shape_cast %5 : vector<1x128x128xbf16> to vector<128x128xbf16>
    %cst = arith.constant dense<0.000000e+00> : vector<8x128xf32>
    %7 = tpu.matmul %4, %6, %cst {dimension_numbers = #tpu.dot_dimension_numbers<[1], [0], [0], [1], [0, 0, 1, 1], [], []>} : vector<8x128xbf16>, vector<128x128xbf16>, vector<8x128xf32> -> vector<8x128xf32>
    %8 = arith.addf %3, %7 : vector<8x128xf32>
    %c0_7 = arith.constant 0 : index
    %c0_8 = arith.constant 0 : index
    %9 = vector.load %arg7[%c0_7, %c0_8] : memref<8x128xf32, #tpu.memory_space<vmem>>, vector<8x128xf32>
    tpu.vector_store %arg7[%c0_7, %c0_8], %8 {strides = array<i32>} : memref<8x128xf32, #tpu.memory_space<vmem>>, vector<8x128xf32>,
    %c1_i32 = arith.constant 1 : i32
    %10 = arith.cmpi eq, %arg2, %c1_i32 : i32
    %c0_9 = arith.constant 0 : index
    %c0_10 = arith.constant 0 : index
    %11 = vector.load %arg7[%c0_9, %c0_10] : memref<8x128xf32, #tpu.memory_space<vmem>>, vector<8x128xf32>
    %c0_11 = arith.constant 0 : index
    %c0_12 = arith.constant 0 : index
    %c0_13 = arith.constant 0 : index
    %12 = vector.load %arg5[%c0_11, %c0_12, %c0_13] : memref<1x1x128xbf16, #tpu.memory_space<vmem>>, vector<1x1x128xbf16>
    %13 = vector.shape_cast %12 : vector<1x1x128xbf16> to vector<1x128xbf16>
    %14 = arith.extf %13 : vector<1x128xbf16> to vector<1x128xf32>
    %15 = vector.broadcast %14 : vector<1x128xf32> to vector<8x128xf32>
    %16 = arith.addf %11, %15 : vector<8x128xf32>
    %c0_i32_14 = arith.constant 0 : i32
    %17 = arith.cmpi eq, %arg1, %c0_i32_14 : i32
    %18 = arith.andi %10, %17 : i1
    %19 = arith.extui %18 : i1 to i32
    %c0_i32_15 = arith.constant 0 : i32
    %20 = arith.cmpi ne, %19, %c0_i32_15 : i32
    scf.if %20 {
      %c0_20 = arith.constant 0 : index
      %c0_21 = arith.constant 0 : index
      %29 = vector.load %arg6[%c0_20, %c0_21] : memref<8x128xf32, #tpu.memory_space<vmem>>, vector<8x128xf32>
      tpu.vector_store %arg6[%c0_20, %c0_21], %16 {strides = array<i32>} : memref<8x128xf32, #tpu.memory_space<vmem>>, vector<8x128xf32>,
    } else {
    }
    %c0_i32_16 = arith.constant 0 : i32
    %21 = arith.cmpi ne, %arg1, %c0_i32_16 : i32
    %22 = arith.andi %10, %21 : i1
    %23 = arith.extui %22 : i1 to i32
    %c0_i32_17 = arith.constant 0 : i32
    %24 = arith.cmpi ne, %23, %c0_i32_17 : i32
    scf.if %24 {
      %c0_20 = arith.constant 0 : index
      %c0_21 = arith.constant 0 : index
      %29 = vector.load %arg6[%c0_20, %c0_21] : memref<8x128xf32, #tpu.memory_space<vmem>>, vector<8x128xf32>
      %30 = arith.addf %29, %16 : vector<8x128xf32>
      %c0_22 = arith.constant 0 : index
      %c0_23 = arith.constant 0 : index
      %31 = vector.load %arg6[%c0_22, %c0_23] : memref<8x128xf32, #tpu.memory_space<vmem>>, vector<8x128xf32>
      tpu.vector_store %arg6[%c0_22, %c0_23], %30 {strides = array<i32>} : memref<8x128xf32, #tpu.memory_space<vmem>>, vector<8x128xf32>,
    } else {
    }
    %c0_i32_18 = arith.constant 0 : i32
    %25 = arith.cmpi eq, %arg1, %c0_i32_18 : i32
    %26 = arith.andi %10, %25 : i1
    %27 = arith.extui %26 : i1 to i32
    %c0_i32_19 = arith.constant 0 : i32
    %28 = arith.cmpi ne, %27, %c0_i32_19 : i32
    scf.if %28 {
      %c0_20 = arith.constant 0 : index
      %c0_21 = arith.constant 0 : index
      %29 = vector.load %arg6[%c0_20, %c0_21] : memref<8x128xf32, #tpu.memory_space<vmem>>, vector<8x128xf32>
      %cst_22 = arith.constant 1.000000e+00 : f32
      %30 = vector.broadcast %cst_22 : f32 to vector<8x128xf32>
      %31 = arith.mulf %29, %30 : vector<8x128xf32>
      %c0_23 = arith.constant 0 : index
      %c0_24 = arith.constant 0 : index
      %32 = vector.load %arg6[%c0_23, %c0_24] : memref<8x128xf32, #tpu.memory_space<vmem>>, vector<8x128xf32>
      tpu.vector_store %arg6[%c0_23, %c0_24], %31 {strides = array<i32>} : memref<8x128xf32, #tpu.memory_space<vmem>>, vector<8x128xf32>,
    } else {
    }
    return
  }
  func.func @transform_0(%arg0: i32, %arg1: i32, %arg2: i32) -> (i32, i32) {
    %c0_i32 = arith.constant 0 : i32
    %c0_i32_0 = arith.constant 0 : i32
    return %c0_i32, %arg2 : i32, i32
  }
  func.func @transform_1(%arg0: i32, %arg1: i32, %arg2: i32) -> (i32, i32, i32) {
    %c0_i32 = arith.constant 0 : i32
    return %arg1, %arg2, %arg0 : i32, i32, i32
  }
  func.func @transform_2(%arg0: i32, %arg1: i32, %arg2: i32) -> (i32, i32, i32) {
    %c0_i32 = arith.constant 0 : i32
    %c0_i32_0 = arith.constant 0 : i32
    return %arg1, %c0_i32, %arg0 : i32, i32, i32
  }
  func.func @transform_3(%arg0: i32, %arg1: i32, %arg2: i32) -> (i32, i32) {
    %c0_i32 = arith.constant 0 : i32
    %c0_i32_0 = arith.constant 0 : i32
    return %c0_i32, %arg0 : i32, i32
  }
}

</mosaic_0001>

<llo_original>
// kernel: ensemble_forward.1
$region0: #{ensemble_forward.1}
  #allocation0 [shape = 'u32[]', space=smem, size = 0x4, offset = 0x4, fixed_abs, tag = 'smem constant byte address 0x4 - core index']
  #allocation1 [shape = 'u32[144,128]{1,0:T(1,128)}', space=vmem, size = 0x12000, scoped, tag = 'internal scratch']
  #allocation2 [shape = 'f32[8,128]{1,0:T(8,128)}', space=vmem, size = 0x1000, scoped, tag = 'scratch operand']
  %s0 = inlined_call_operand.hbm [shape: bf16[8,256], index: 0, kind: input, shape index: {}]
  %s1 = inlined_call_operand.hbm [shape: bf16[1,256,256], index: 1, kind: input, shape index: {}]
  %s2 = inlined_call_operand.hbm [shape: bf16[1,1,256], index: 2, kind: input, shape index: {}]
  %s3 = inlined_call_operand.hbm [shape: f32[8,256], index: 3, kind: output, shape index: {}]
  %s4 = sld [smem:[#allocation0]]
  $region73: #{ensemble_forward.1} parent=0
    _
  %s6 = ssub.s32 1, %s4
  %s7 = scalar_select 0, %s6, %s4
  $region1: #{ensemble_forward.1} parent=0
    #allocation3 [shape = 'u8[4096]{0}', space=vmem, size = 0x1000, scoped, tag = 'input window, operand 0']
    #allocation4 [shape = 's32[2]{0}', space=sflag, size = 0x8, scoped, tag = 'scoped memory for ensemble_forward.1']
    #allocation5 [shape = 's32[2]{0}', space=sflag, size = 0x8, scoped, tag = 'scoped memory for ensemble_forward.1']
    #allocation6 [shape = 'u8[65536]{0}', space=vmem, size = 0x10000, scoped, tag = 'input window, operand 1']
    #allocation7 [shape = 's32[2]{0}', space=sflag, size = 0x8, scoped, tag = 'scoped memory for ensemble_forward.1']
    #allocation8 [shape = 'u8[1024]{0}', space=vmem, size = 0x400, scoped, tag = 'input window, operand 2']
    #allocation9 [shape = 'u8[8192]{0}', space=vmem, size = 0x2000, scoped, tag = 'output window, operand 0']
    %8 = vsyncpa [#allocation4], 0
    %s9 = scalar_lea.sflag [#allocation4], 1
    %10 = vsyncpa %s9, 0
    %11 = vsyncpa [#allocation7], 0
    %s12 = scalar_lea.sflag [#allocation7], 1
    %13 = vsyncpa %s12, 0
    %14 = vsyncpa [#allocation5], 0
    %s15 = scalar_lea.sflag [#allocation5], 1
    %16 = vsyncpa %s15, 0
    loop: start=0, step=1, limit=6
    $region2: #{ensemble_forward.1} parent=1 // loop_pre_header
      _
    $region3: #{ensemble_forward.1} parent=1 // loop_header
      %s18 = sphi 0, %s22
      %p19 = scmp.ge.s32.totalorder %s18, 6
      %s25 = sphi 0, %s44
      %s26 = sphi 0, %s40
      %s27 = sphi 0, %s36
      %s28 = sphi 0, %s25
      %s29 = sphi 0, %s26
      %s30 = sphi 0, %s27
      %s31 = sphi 0, %s28
      %s32 = sphi 0, %s29
      %s33 = sphi 0, %s30
      %s47 = sphi 0, %s49
      %s50 = sphi 0, %s47
      %s51 = sphi 0, %s50
      %s67 = sphi 0, %s51
      %s77 = sphi 0, %s79
      %s80 = sphi 0, %s77
      %s81 = sphi 0, %s80
      %s97 = sphi 0, %s81
      %s105 = sphi 0, %s107
      %s108 = sphi 0, %s105
      %s109 = sphi 0, %s108
      %s125 = sphi 0, %s109
      %s131 = sphi 0, %s133
      %s134 = sphi 0, %s131
      %s135 = sphi 0, %s134
      %s151 = sphi 0, %s135
    $region4: #{ensemble_forward.1} parent=1 // loop_header_branch
      %21 = sbr.rel (%p19) target = $region8
    $region5: #{ensemble_forward.1} parent=1 // loop_body
      %s23 = ssub.s32 %s18, 1
      %s24 = ssub.s32 %s18, 2
      %s34 = sadd.s32 1, %s27
      %p35 = scmp.ge.s32.totalorder %s34, 2
      %s36 = scalar_select %p35, 0, %s34
      %s37 = sadd.s32 1, %s26
      %s38 = scalar_select %p35, %s37, %s26
      %p39 = scmp.ge.s32.totalorder %s38, 1
      %s40 = scalar_select %p39, 0, %s38
      %s41 = sadd.s32 1, %s25
      %s42 = scalar_select %p39, %s41, %s25
      %p43 = scmp.ge.s32.totalorder %s42, 2
      %s44 = scalar_select %p43, 0, %s42
      %s45 = ssub.s32 %s27, %s36
      %p46 = scmp.eq.s32.totalorder %s45, 0
      %s48 = sadd.s32 %s47, 1
      %s49 = scalar_select %p46, %s47, %s48
      %p52 = pneg %p46
      %p53 = scmp.eq.s32.totalorder %s18, 3
      %p54 = por %p52, %p53
      %p55 = scmp.ne.s32.totalorder %s47, %s50
      %p56 = scmp.eq.s32.totalorder %s18, 0
      %p57 = por %p55, %p56
      %p58 = scmp.ne.s32.totalorder %s47, %s50
      %p59 = scmp.eq.s32.totalorder %s23, 3
      %p60 = por %p58, %p59
      %p61 = scmp.ne.s32.totalorder %s50, %s51
      %p62 = scmp.eq.s32.totalorder %s23, 0
      %p63 = por %p61, %p62
      %p64 = scmp.ne.s32.totalorder %s50, %s51
      %p65 = scmp.eq.s32.totalorder %s24, 3
      %p66 = por %p64, %p65
      %p68 = scmp.ne.s32.totalorder %s51, %s67
      %p69 = scmp.eq.s32.totalorder %s24, 0
      %p70 = por %p68, %p69
      %s71 = ssub.s32 %s26, %s40
      %s72 = ssub.s32 %s27, %s36
      %s73 = sor.u32 %s71, %s72
      %s74 = ssub.s32 %s25, %s44
      %s75 = sor.u32 %s73, %s74
      %p76 = scmp.eq.s32.totalorder %s75, 0
      %s78 = sadd.s32 %s77, 1
      %s79 = scalar_select %p76, %s77, %s78
      %p82 = pneg %p76
      %p83 = scmp.eq.s32.totalorder %s18, 3
      %p84 = por %p82, %p83
      %p85 = scmp.ne.s32.totalorder %s77, %s80
      %p86 = scmp.eq.s32.totalorder %s18, 0
      %p87 = por %p85, %p86
      %p88 = scmp.ne.s32.totalorder %s77, %s80
      %p89 = scmp.eq.s32.totalorder %s23, 3
      %p90 = por %p88, %p89
      %p91 = scmp.ne.s32.totalorder %s80, %s81
      %p92 = scmp.eq.s32.totalorder %s23, 0
      %p93 = por %p91, %p92
      %p94 = scmp.ne.s32.totalorder %s80, %s81
      %p95 = scmp.eq.s32.totalorder %s24, 3
      %p96 = por %p94, %p95
      %p98 = scmp.ne.s32.totalorder %s81, %s97
      %p99 = scmp.eq.s32.totalorder %s24, 0
      %p100 = por %p98, %p99
      %s101 = ssub.s32 %s26, %s40
      %s102 = ssub.s32 %s25, %s44
      %s103 = sor.u32 %s101, %s102
      %p104 = scmp.eq.s32.totalorder %s103, 0
      %s106 = sadd.s32 %s105, 1
      %s107 = scalar_select %p104, %s105, %s106
      %p110 = pneg %p104
      %p111 = scmp.eq.s32.totalorder %s18, 3
      %p112 = por %p110, %p111
      %p113 = scmp.ne.s32.totalorder %s105, %s108
      %p114 = scmp.eq.s32.totalorder %s18, 0
      %p115 = por %p113, %p114
      %p116 = scmp.ne.s32.totalorder %s105, %s108
      %p117 = scmp.eq.s32.totalorder %s23, 3
      %p118 = por %p116, %p117
      %p119 = scmp.ne.s32.totalorder %s108, %s109
      %p120 = scmp.eq.s32.totalorder %s23, 0
      %p121 = por %p119, %p120
      %p122 = scmp.ne.s32.totalorder %s108, %s109
      %p123 = scmp.eq.s32.totalorder %s24, 3
      %p124 = por %p122, %p123
      %p126 = scmp.ne.s32.totalorder %s109, %s125
      %p127 = scmp.eq.s32.totalorder %s24, 0
      %p128 = por %p126, %p127
      %s129 = ssub.s32 %s25, %s44
      %p130 = scmp.eq.s32.totalorder %s129, 0
      %s132 = sadd.s32 %s131, 1
      %s133 = scalar_select %p130, %s131, %s132
      %p136 = pneg %p130
      %p137 = scmp.eq.s32.totalorder %s18, 3
      %p138 = por %p136, %p137
      %p139 = scmp.ne.s32.totalorder %s131, %s134
      %p140 = scmp.eq.s32.totalorder %s18, 0
      %p141 = por %p139, %p140
      %p142 = scmp.ne.s32.totalorder %s131, %s134
      %p143 = scmp.eq.s32.totalorder %s23, 3
      %p144 = por %p142, %p143
      %p145 = scmp.ne.s32.totalorder %s134, %s135
      %p146 = scmp.eq.s32.totalorder %s23, 0
      %p147 = por %p145, %p146
      %p148 = scmp.ne.s32.totalorder %s134, %s135
      %p149 = scmp.eq.s32.totalorder %s24, 3
      %p150 = por %p148, %p149
      %p152 = scmp.ne.s32.totalorder %s135, %s151
      %p153 = scmp.eq.s32.totalorder %s24, 0
      %p154 = por %p152, %p153
      %p155 = scmp.le.s32.totalorder 1, %s18
      %p156 = scmp.lt.s32.totalorder %s18, 5
      %p157 = pnand %p155, %p156
      %p158 = pneg %p157
      // Predicated region
      $region9: #{ensemble_forward.1} parent=5 // pred_check
        _
      $region10: #{ensemble_forward.1} parent=5 // pred_check_branch
        %160 = sbr.rel (%p157) target = $region12
      $region11: #{ensemble_forward.1} parent=5 // pred_region
        %s161 = ssub.s32 %s18, 1
      $region12: #{ensemble_forward.1} parent=5 // pred_fallthru
        _
      %p162 = scmp.lt.s32.totalorder %s18, 4
      // Predicated region
      $region13: #{ensemble_forward.1} parent=5 // pred_check
        %p163 = pneg %p162
      $region14: #{ensemble_forward.1} parent=5 // pred_check_branch
        %165 = sbr.rel (%p163) target = $region16
      $region15: #{ensemble_forward.1} parent=5 // pred_region
        // Predicated region
        $region17: #{ensemble_forward.1} parent=15 // pred_check
          %p166 = pneg %p57
        $region18: #{ensemble_forward.1} parent=15 // pred_check_branch
          %168 = sbr.rel (%p166) target = $region20
        $region19: #{ensemble_forward.1} parent=15 // pred_region
          %s169 = sand.u32 %s47, 1
          %s170 = scalar_lea.sflag [#allocation4], %s169
          %s171 = sand.u32 %s47, 1
          %s172 = smul.addr %s171, 4
          %s173 = scalar_lea.vmem [#allocation3], %s172
          %s175 = ssub.s32 64, 64
          %176 = vsyncadd %s170, %s175
          %s177 = smul.addr %s27, 64
          %s178 = scalar_lea.hbm %s0, %s177
          %s180 = sshll.u32 %s173, 4
          %s181 = int_to_ptr.vmem [resolvable:$true] %s180
          %183 = dma.hbm_to_vmem [thread:$0]  %s178, 64, %s181, %s170
        $region20: #{ensemble_forward.1} parent=15 // pred_fallthru
          _
        // Predicated region
        $region21: #{ensemble_forward.1} parent=15 // pred_check
          %p184 = pneg %p87
        $region22: #{ensemble_forward.1} parent=15 // pred_check_branch
          %186 = sbr.rel (%p184) target = $region24
        $region23: #{ensemble_forward.1} parent=15 // pred_region
          %s187 = sand.u32 %s18, 1
          %s188 = scalar_lea.sflag [#allocation7], %s187
          %s189 = sand.u32 %s77, 1
          %s190 = smul.addr %s189, 64
          %s191 = scalar_lea.vmem [#allocation6], %s190
          %s192 = smul.u32 16, %s27
          %s194 = ssub.s32 1024, 1024
          %195 = vsyncadd %s188, %s194
          %s196 = smul.addr %s192, 2
          %s197 = sadd.s32 %s25, %s196
          %s198 = smul.addr %s26, 64
          %s199 = sadd.s32 %s197, %s198
          %s200 = smul.addr %s199, 64
          %s201 = scalar_lea.hbm %s1, %s200
          %s202 = sshll.u32 %s191, 4
          %s203 = int_to_ptr.vmem [resolvable:$true] %s202
          %208 = dma.hbm_to_vmem [thread:$0]  %s201, 1024, %s203, %s188, 128, 64, 4
        $region24: #{ensemble_forward.1} parent=15 // pred_fallthru
          _
        // Predicated region
        $region25: #{ensemble_forward.1} parent=15 // pred_check
          %p209 = pneg %p115
        $region26: #{ensemble_forward.1} parent=15 // pred_check_branch
          %211 = sbr.rel (%p209) target = $region28
        $region27: #{ensemble_forward.1} parent=15 // pred_region
          %s212 = sand.u32 %s18, 1
          %s213 = scalar_lea.sflag [#allocation7], %s212
          %s214 = sand.u32 %s105, 1
          %s215 = scalar_lea.vmem [#allocation8], %s214
          %s217 = ssub.s32 16, 16
          %218 = vsyncadd %s213, %s217
          %s219 = smul.addr %s26, 2
          %s220 = sadd.s32 %s25, %s219
          %s221 = smul.addr %s220, 16
          %s222 = scalar_lea.hbm %s2, %s221
          %s224 = sshll.u32 %s215, 4
          %s225 = int_to_ptr.vmem [resolvable:$true] %s224
          %227 = dma.hbm_to_vmem [thread:$0]  %s222, 16, %s225, %s213
        $region28: #{ensemble_forward.1} parent=15 // pred_fallthru
          _
      $region16: #{ensemble_forward.1} parent=5 // pred_fallthru
        _
      %p228 = scmp.le.s32.totalorder 1, %s18
      %p229 = scmp.lt.s32.totalorder %s18, 5
      %p230 = pnand %p228, %p229
      %p231 = pneg %p230
      // Predicated region
      $region29: #{ensemble_forward.1} parent=5 // pred_check
        _
      $region30: #{ensemble_forward.1} parent=5 // pred_check_branch
        %233 = sbr.rel (%p230) target = $region32
      $region31: #{ensemble_forward.1} parent=5 // pred_region
        %s234 = ssub.s32 %s18, 1
        %s235 = sand.u32 %s50, 1
        %s236 = scalar_lea.sflag [#allocation4], %s235
        %s237 = sand.u32 %s50, 1
        %s238 = smul.addr %s237, 4
        %s239 = scalar_lea.vmem [#allocation3], %s238
        // Predicated region
        $region33: #{ensemble_forward.1} parent=31 // pred_check
          %p240 = pneg %p63
        $region34: #{ensemble_forward.1} parent=31 // pred_check_branch
          %242 = sbr.rel (%p240) target = $region36
        $region35: #{ensemble_forward.1} parent=31 // pred_region
          %243 = dma.done %s236, 64
        $region36: #{ensemble_forward.1} parent=31 // pred_fallthru
          _
        %s244 = sand.u32 %s23, 1
        %s245 = scalar_lea.sflag [#allocation7], %s244
        %s246 = sand.u32 %s80, 1
        %s247 = smul.addr %s246, 64
        %s248 = scalar_lea.vmem [#allocation6], %s247
        // Predicated region
        $region37: #{ensemble_forward.1} parent=31 // pred_check
          %p249 = pneg %p93
        $region38: #{ensemble_forward.1} parent=31 // pred_check_branch
          %251 = sbr.rel (%p249) target = $region40
        $region39: #{ensemble_forward.1} parent=31 // pred_region
          %252 = dma.done %s245, 1024
        $region40: #{ensemble_forward.1} parent=31 // pred_fallthru
          _
        %s253 = sand.u32 %s23, 1
        %s254 = scalar_lea.sflag [#allocation7], %s253
        %s255 = sand.u32 %s108, 1
        %s256 = scalar_lea.vmem [#allocation8], %s255
        // Predicated region
        $region41: #{ensemble_forward.1} parent=31 // pred_check
          %p257 = pneg %p121
        $region42: #{ensemble_forward.1} parent=31 // pred_check_branch
          %259 = sbr.rel (%p257) target = $region44
        $region43: #{ensemble_forward.1} parent=31 // pred_region
          %260 = dma.done %s254, 16
        $region44: #{ensemble_forward.1} parent=31 // pred_fallthru
          _
        %s261 = sand.u32 %s50, 1
        %s262 = scalar_lea.sflag [#allocation4], %s261
        %s263 = sand.u32 %s50, 1
        %s264 = smul.addr %s263, 4
        %s265 = scalar_lea.vmem [#allocation3], %s264
        %p266 = pneg %p63
        %p267 = pneg %p60
        %s268 = sand.u32 %s23, 1
        %s269 = scalar_lea.sflag [#allocation7], %s268
        %s270 = sand.u32 %s80, 1
        %s271 = smul.addr %s270, 64
        %s272 = scalar_lea.vmem [#allocation6], %s271
        %p273 = pneg %p93
        %p274 = pneg %p90
        %s275 = sand.u32 %s23, 1
        %s276 = scalar_lea.sflag [#allocation7], %s275
        %s277 = sand.u32 %s108, 1
        %s278 = scalar_lea.vmem [#allocation8], %s277
        %p279 = pneg %p121
        %p280 = pneg %p118
        %p281 = pneg %p147
        %p282 = pneg %p144
        %s283 = sand.u32 %s134, 1
        %s284 = scalar_lea.sflag [#allocation5], %s283
        %s285 = sand.u32 %s134, 1
        %s286 = smul.addr %s285, 8
        %s287 = scalar_lea.vmem [#allocation9], %s286
        %s288 = smul.u32 16, %s30
        %p290 = scmp.eq.s32.totalorder %s30, 0
        // Predicated region
        $region45: #{ensemble_forward.1} parent=31 // pred_check
          %p291 = pneg %p290
        $region46: #{ensemble_forward.1} parent=31 // pred_check_branch
          %293 = sbr.rel (%p291) target = $region48
        $region47: #{ensemble_forward.1} parent=31 // pred_region
          %294 = vst [vmem:[#allocation2] sm:$0xff] 0.0
        $region48: #{ensemble_forward.1} parent=31 // pred_fallthru
          _
        %v295 = vld [vmem:[#allocation2] sm:$0xff]
        %v296 = vld [vmem:[%s239] sm:$0xf]
        %v297 = vld [vmem:[%s248] sm:$0xf]
        %v298 = vld [vmem:[%s248 + $0x4] sm:$0xf]
        %v299 = vld [vmem:[%s248 + $0x8] sm:$0xf]
        %v300 = vld [vmem:[%s248 + $0xc] sm:$0xf]
        %v301 = vld [vmem:[%s248 + $0x10] sm:$0xf]
        %v302 = vld [vmem:[%s248 + $0x14] sm:$0xf]
        %v303 = vld [vmem:[%s248 + $0x18] sm:$0xf]
        %v304 = vld [vmem:[%s248 + $0x1c] sm:$0xf]
        %v305 = vld [vmem:[%s248 + $0x20] sm:$0xf]
        %v306 = vld [vmem:[%s248 + $0x24] sm:$0xf]
        %v307 = vld [vmem:[%s248 + $0x28] sm:$0xf]
        %v308 = vld [vmem:[%s248 + $0x2c] sm:$0xf]
        %v309 = vld [vmem:[%s248 + $0x30] sm:$0xf]
        %v310 = vld [vmem:[%s248 + $0x34] sm:$0xf]
        %v311 = vld [vmem:[%s248 + $0x38] sm:$0xf]
        %v312 = vld [vmem:[%s248 + $0x3c] sm:$0xf]
        %v329 = vunpack.c.l.b16 %v297
        %v330 = vunpack.c.l.b16 %v298
        %v331 = vunpack.c.l.b16 %v299
        %v332 = vunpack.c.l.b16 %v300
        %v333 = vunpack.c.l.b16 %v301
        %v334 = vunpack.c.l.b16 %v302
        %v335 = vunpack.c.l.b16 %v303
        %v336 = vunpack.c.l.b16 %v304
        %v337 = vunpack.c.l.b16 %v305
        %v338 = vunpack.c.l.b16 %v306
        %v339 = vunpack.c.l.b16 %v307
        %v340 = vunpack.c.l.b16 %v308
        %v341 = vunpack.c.l.b16 %v309
        %v342 = vunpack.c.l.b16 %v310
        %v343 = vunpack.c.l.b16 %v311
        %v344 = vunpack.c.l.b16 %v312
        %v345 = vpack.c.b16 %v330, %v329
        %v346 = vpack.c.b16 %v332, %v331
        %v347 = vpack.c.b16 %v334, %v333
        %v348 = vpack.c.b16 %v336, %v335
        %v349 = vpack.c.b16 %v338, %v337
        %v350 = vpack.c.b16 %v340, %v339
        %v351 = vpack.c.b16 %v342, %v341
        %v352 = vpack.c.b16 %v344, %v343
        %361 = vmatprep.subr.bf16.mxu0 0
        %362 = vmatpush1.bf16.msra.mxu0 %v345
        %363 = vmatprep.subr.bf16.mxu0 0
        %364 = vmatpush1.bf16.msra.mxu0 %v346
        %365 = vmatprep.subr.bf16.mxu0 0
        %366 = vmatpush1.bf16.msra.mxu0 %v347
        %367 = vmatprep.subr.bf16.mxu0 0
        %368 = vmatpush1.bf16.msra.mxu0 %v348
        %369 = vmatprep.subr.bf16.mxu0 0
        %370 = vmatpush1.bf16.msra.mxu0 %v349
        %371 = vmatprep.subr.bf16.mxu0 0
        %372 = vmatpush1.bf16.msra.mxu0 %v350
        %373 = vmatprep.subr.bf16.mxu0 0
        %374 = vmatpush1.bf16.msra.mxu0 %v351
        %375 = vmatprep.subr.bf16.mxu0 0
        %376 = vmatpush1.bf16.msra.mxu0 %v352
        %377 = vmatprep.subr.bf16.mxu0 0
        %378 = vmatpush1.bf16.msra.mxu0 0
        %379 = vmatprep.subr.bf16.mxu0 0
        %380 = vmatpush1.bf16.msra.mxu0 0
        %381 = vmatprep.subr.bf16.mxu0 0
        %382 = vmatpush1.bf16.msra.mxu0 0
        %383 = vmatprep.subr.bf16.mxu0 0
        %384 = vmatpush1.bf16.msra.mxu0 0
        %385 = vmatprep.subr.bf16.mxu0 0
        %386 = vmatpush1.bf16.msra.mxu0 0
        %387 = vmatprep.subr.bf16.mxu0 0
        %388 = vmatpush1.bf16.msra.mxu0 0
        %389 = vmatprep.subr.bf16.mxu0 0
        %390 = vmatpush1.bf16.msra.mxu0 0
        %391 = vmatprep.subr.bf16.mxu0 0
        %392 = vmatpush1.bf16.msra.mxu0 0
        %393 = vmatprep.mubr.bf16.mxu0 0
        %394 = vmatmul.mubr.bf16.gmra.mrb[0].mxu0 %v296
        %v395 = vpop.f32.mrb[0].mxu0
        %v396 = vadd.f32 0.0, %v395
        %v397 = vpop.f32.mrb[0].mxu0
        %v398 = vpop.f32.mrb[0].mxu0
        %v399 = vpop.f32.mrb[0].mxu0
        %400 = vdwg.mxu0
        %v401 = vadd.f32 %v295, %v396
        %402 = vst [vmem:[#allocation2] sm:$0xff] %v401
        %p403 = scmp.eq.s32.totalorder %s30, 1
        %v404 = vld [vmem:[#allocation2] sm:$0xff]
        %v405 = vld [vmem:[%s256] sm:$0x1]
        %v406 = vunpack.c.l.bf16 %v405
        %v407 = vlaneseq
        %v408 = vshrl.u32 %v407, 7
        %v409 = vsub.s32 0, %v408
        %v410 = vrot.slane %v406, %v409
        %v411 = vadd.f32 %v404, %v410
        %p412 = scmp.eq.s32.totalorder %s29, 0
        %p413 = pnand %p403, %p412
        %p414 = pneg %p413
        // Predicated region
        $region49: #{ensemble_forward.1} parent=31 // pred_check
          _
        $region50: #{ensemble_forward.1} parent=31 // pred_check_branch
          %416 = sbr.rel (%p413) target = $region52
        $region51: #{ensemble_forward.1} parent=31 // pred_region
          %417 = vst [vmem:[%s287] sm:$0xff] %v411
        $region52: #{ensemble_forward.1} parent=31 // pred_fallthru
          _
        %p418 = scmp.ne.s32.totalorder %s29, 0
        %p419 = pnand %p403, %p418
        %p420 = pneg %p419
        // Predicated region
        $region53: #{ensemble_forward.1} parent=31 // pred_check
          _
        $region54: #{ensemble_forward.1} parent=31 // pred_check_branch
          %422 = sbr.rel (%p419) target = $region56
        $region55: #{ensemble_forward.1} parent=31 // pred_region
          %v423 = vld [vmem:[%s287] sm:$0xff]
          %v424 = vadd.f32 %v423, %v411
          %425 = vst [vmem:[%s287] sm:$0xff] %v424
        $region56: #{ensemble_forward.1} parent=31 // pred_fallthru
          _
        // Predicated region
        $region57: #{ensemble_forward.1} parent=31 // pred_check
          _
        $region58: #{ensemble_forward.1} parent=31 // pred_check_branch
          %427 = sbr.rel (%p413) target = $region60
        $region59: #{ensemble_forward.1} parent=31 // pred_region
          %v428 = vld [vmem:[%s287] sm:$0xff]
          %429 = vst [vmem:[%s287] sm:$0xff] %v428
        $region60: #{ensemble_forward.1} parent=31 // pred_fallthru
          _
        %s430 = sand.u32 %s134, 1
        %s431 = scalar_lea.sflag [#allocation5], %s430
        %s432 = sand.u32 %s134, 1
        %s433 = smul.addr %s432, 8
        %s434 = scalar_lea.vmem [#allocation9], %s433
        // Predicated region
        $region61: #{ensemble_forward.1} parent=31 // pred_check
          %p435 = pneg %p144
        $region62: #{ensemble_forward.1} parent=31 // pred_check_branch
          %437 = sbr.rel (%p435) target = $region64
        $region63: #{ensemble_forward.1} parent=31 // pred_region
          %s439 = ssub.s32 128, 128
          %440 = vsyncadd %s431, %s439
          %s441 = smul.addr %s28, 128
          %s442 = scalar_lea.hbm %s3, %s441
          %s444 = sshll.u32 %s434, 4
          %s445 = int_to_ptr.vmem [resolvable:$true] %s444
          %447 = dma.vmem_to_hbm [thread:$0]  %s445, 128, %s442, %s431
        $region64: #{ensemble_forward.1} parent=31 // pred_fallthru
          _
      $region32: #{ensemble_forward.1} parent=5 // pred_fallthru
        _
      %p448 = scmp.le.s32.totalorder 2, %s18
      // Predicated region
      $region65: #{ensemble_forward.1} parent=5 // pred_check
        %p449 = pneg %p448
      $region66: #{ensemble_forward.1} parent=5 // pred_check_branch
        %451 = sbr.rel (%p449) target = $region68
      $region67: #{ensemble_forward.1} parent=5 // pred_region
        %s452 = ssub.s32 %s18, 2
        // Predicated region
        $region69: #{ensemble_forward.1} parent=67 // pred_check
          %p453 = pneg %p150
        $region70: #{ensemble_forward.1} parent=67 // pred_check_branch
          %455 = sbr.rel (%p453) target = $region72
        $region71: #{ensemble_forward.1} parent=67 // pred_region
          %s456 = sand.u32 %s135, 1
          %s457 = scalar_lea.sflag [#allocation5], %s456
          %s458 = sand.u32 %s135, 1
          %s459 = smul.addr %s458, 8
          %s460 = scalar_lea.vmem [#allocation9], %s459
          %461 = dma.done %s457, 128
        $region72: #{ensemble_forward.1} parent=67 // pred_fallthru
          _
      $region68: #{ensemble_forward.1} parent=5 // pred_fallthru
        _
    $region6: #{ensemble_forward.1} parent=1 // loop_footer
      %s22 = sadd.s32 1, %s18
    $region7: #{ensemble_forward.1} parent=1 // loop_footer_branch
      %17 = sbr.rel target = $region3
    $region8: #{ensemble_forward.1} parent=1 // loop_exit
      _
    %462 = vsyncpa [#allocation4], 1
    %s463 = scalar_lea.sflag [#allocation4], 1
    %464 = vsyncpa %s463, 1
    %465 = vsyncpa [#allocation7], 1
    %s466 = scalar_lea.sflag [#allocation7], 1
    %467 = vsyncpa %s466, 1
    %468 = vsyncpa [#allocation5], 1
    %s469 = scalar_lea.sflag [#allocation5], 1
    %470 = vsyncpa %s469, 1

</llo_original>
